<compile_context>
chip_gen: v6e
topology: v6e:2x2x1
jax: 0.10.0
libtpu: 0.0.40
codegen_flags: <defaults>
</compile_context>

<pallas_src>
import numpy as np

import jax
import jax.numpy as jnp
from jax import lax
from jax.experimental import pallas as pl
from jax.experimental.pallas import tpu as pltpu


LEAKY_SLOPE = 0.1


# ----------------------------------------------------------------------------
# Fused kernel factory: full res-path (BN -> LeakyReLU -> Conv per layer) plus
# the final channel concat, one batch element per grid step.
# ----------------------------------------------------------------------------
def _make_fused_kernel(H, W, metas, c_in):
    n_layers = len(metas)

    def kernel(*refs):
        x_ref = refs[0]                               # (1, H, W*c_in) input rows
        wb_refs = refs[1:1 + n_layers]                # banded conv weights (bf16)
        pp_ref = refs[1 + n_layers]                   # packed scale/shift/bias rows
        o_ref = refs[2 + n_layers]                    # (1, H, W*Cres + W*c_in)
        b_refs = refs[3 + n_layers:]                  # per-layer banded-LHS scratch

        x = x_ref[0].astype(jnp.float32)              # (H, W*c_in)  == pre_res
        h = x
        for li, m in enumerate(metas):
            cin, cout = m['cin'], m['cout']
            ks, dil, pad, pw = m['ks'], m['dil'], m['pad'], m['pw']
            r0 = 3 * li

            # folded inference BatchNorm + LeakyReLU(0.1), lane-dense (H, W*cin)
            a = h * pp_ref[r0:r0 + 1, :W * cin] + pp_ref[r0 + 1:r0 + 2, :W * cin]
            a = jnp.where(a >= 0.0, a, LEAKY_SLOPE * a)

            # Scatter the activation into the zeroed banded-LHS scratch.  Rows /
            # lanes that are never written stay 0 and reproduce the conv's zero
            # padding exactly (no iota/where masking, no jnp.pad anywhere).
            b_ref = b_refs[li]
            b_ref[...] = jnp.zeros_like(b_ref)
            for ky in range(ks):
                ylo = max(0, pad - ky * dil)
                yhi = min(H, H + pad - ky * dil)
                if yhi <= ylo:
                    continue
                lane0 = ky * pw * cin + pad * cin
                b_ref[ylo:yhi, lane0:lane0 + W * cin] = (
                    a[ylo + ky * dil - pad:yhi + ky * dil - pad, :])

            # ONE lane-dense MXU matmul per layer:
            #   (H, ks*PW*cin) @ (ks*PW*cin, W*cout), bf16 operands, f32 accumulate.
            h = jnp.dot(b_ref[...].astype(jnp.bfloat16), wb_refs[li][...],
                        preferred_element_type=jnp.float32)
            h = h + pp_ref[r0 + 2:r0 + 3, :W * cout]          # conv bias (f32, exact)

        # torch.cat([pre_res, res_path], dim=1), written as one lane-dense slab
        # [res | pre]: res starts at lane 0 (128-aligned), pre is an exact f32 copy.
        o_ref[0] = jnp.concatenate([h, x], axis=1).astype(o_ref.dtype)

    return kernel


# ----------------------------------------------------------------------------
# Wrapper-side weight prep: expand (k, k, Cin, Cout) conv weights into the banded
# row-im2col matrix consumed by the single in-kernel matmul.
#   Wb[ky*PW*Cin + (x + kx*dil)*Cin + c, x*Cout + o] = w[ky, kx, c, o]
# ----------------------------------------------------------------------------
def _banded_conv_weight(w_hwio, W, dil):
    ks, _, cin, cout = w_hwio.shape
    pad = ((ks - 1) // 2) * dil
    pw = W + 2 * pad
    k_rows = ks * pw * cin
    wb = np.zeros((k_rows, W * cout), np.float32)
    w_np = np.asarray(w_hwio, np.float32)
    for ky in range(ks):
        for kx in range(ks):
            for x in range(W):
                p = x + kx * dil
                r0 = ky * pw * cin + p * cin
                c0 = x * cout
                wb[r0:r0 + cin, c0:c0 + cout] = w_np[ky, kx]
    # bf16 weights -> native MXU rate on v6e/v7x, halved VMEM footprint.
    return jnp.asarray(wb, dtype=jnp.bfloat16), pad, pw, k_rows


def prepare_fused_params(params, in_channels, H, W):
    """Precompute banded weights, packed per-layer params and layer metadata."""
    assert len(params) >= 1
    metas, wbs, pp_rows = [], [], []
    cin = in_channels
    max_w = 0
    for p in params:
        cout = p['w_hwio'].shape[-1]
        wb, pad, pw, k_rows = _banded_conv_weight(p['w_hwio'], W, p['dilation'])
        metas.append(dict(cin=cin, cout=cout, ks=p['ksize'], dil=p['dilation'],
                          pad=pad, pw=pw, K=k_rows))
        wbs.append(wb)
        # scale/shift tiled over W (lane = x*Cin + c), bias tiled over W (x*Cout + o)
        pp_rows.append(np.tile(np.asarray(p['scale'], np.float32).reshape(-1), W))
        pp_rows.append(np.tile(np.asarray(p['shift'], np.float32).reshape(-1), W))
        pp_rows.append(np.tile(np.asarray(p['bias'], np.float32).reshape(-1), W))
        max_w = max(max_w, W * cin, W * cout)
        cin = cout
    pp = np.zeros((len(pp_rows), max_w), np.float32)
    for i, row in enumerate(pp_rows):
        pp[i, :row.shape[0]] = row
    return dict(metas=metas, wb=wbs, pp=jnp.asarray(pp),
                H=H, W=W, c_in=in_channels, c_res=cin)


# ----------------------------------------------------------------------------
# MakeLayers.forward: NCHW in -> NCHW out, one fused Pallas call.
# ----------------------------------------------------------------------------
def make_layers_forward(x_nchw, fused):
    N, C, H, W = x_nchw.shape
    metas = fused['metas']
    assert (C, H, W) == (fused['c_in'], fused['H'], fused['W'])
    c_res = metas[-1]['cout']
    res_lanes = W * c_res
    out_lanes = res_lanes + W * C

    # NCHW -> NHWC -> (N, H, W*C) row slabs (channels-last, W*C contiguous lanes).
    x_rows = jnp.transpose(x_nchw, (0, 2, 3, 1)).reshape(N, H, W * C)

    kernel = _make_fused_kernel(H, W, metas, C)

    in_specs = [pl.BlockSpec((1, H, W * C), lambda n: (n, 0, 0))]
    for wb in fused['wb']:
        in_specs.append(pl.BlockSpec(wb.shape, lambda n: (0, 0)))
    in_specs.append(pl.BlockSpec(fused['pp'].shape, lambda n: (0, 0)))

    y_rows = pl.pallas_call(
        kernel,
        out_shape=jax.ShapeDtypeStruct((N, H, out_lanes), x_nchw.dtype),
        grid_spec=pltpu.PrefetchScalarGridSpec(
            num_scalar_prefetch=0,
            # One batch element per grid step; 'parallel' lets v7x megacore split
            # the batch across its two TensorCores (N=2 -> one each).
            # TODO(synk): for N==1 or large H*W add an H-tile grid axis so both
            #             v7x cores stay busy and blocks fit its 64 MiB VMEM.
            grid=(N,),
            in_specs=in_specs,
            out_specs=pl.BlockSpec((1, H, out_lanes), lambda n: (n, 0, 0)),
            scratch_shapes=[pltpu.VMEM((H, m['K']), jnp.float32) for m in metas],
        ),
        compiler_params=pltpu.CompilerParams(
            dimension_semantics=("parallel",)),
    )(x_rows, *fused['wb'], fused['pp'])

    # Layout plumbing only — one fused XLA copy that is needed anyway for NCHW:
    res = y_rows[:, :, :res_lanes].reshape(N, H, W, c_res)
    pre = y_rows[:, :, res_lanes:].reshape(N, H, W, C)
    out_nhwc = jnp.concatenate([pre, res], axis=-1)   # cat([pre_res, res_path], 1)
    return jnp.transpose(out_nhwc, (0, 3, 1, 2))


# ----------------------------------------------------------------------------
# Parameter construction mirroring MakeLayers.__init__ (flat cfg, concat path)
# ----------------------------------------------------------------------------
def init_make_layers_params(key, in_channels, net_cfg):
    params = []
    init_flag = True
    chan = in_channels
    for item in net_cfg:
        if item == 'M':
            raise NotImplementedError("MaxPool 'M' not exercised in this demo cfg")
        out_c, ks = item[0], item[1]
        dil = item[2] if len(item) == 3 else 1
        if init_flag:
            # first conv item with res_type='concat' -> passthrough(); no params
            init_flag = False
            continue
        key, k1, k2, k3, k4, k5, k6 = jax.random.split(key, 7)
        w_oihw = jax.random.normal(k1, (out_c, chan, ks, ks), jnp.float32) * 0.1
        b = jax.random.normal(k2, (out_c,), jnp.float32) * 0.05
        gamma = 1.0 + 0.1 * jax.random.normal(k3, (chan,), jnp.float32)
        beta = 0.1 * jax.random.normal(k4, (chan,), jnp.float32)
        rmean = 0.1 * jax.random.normal(k5, (chan,), jnp.float32)
        rvar = 1.0 + 0.1 * jnp.abs(jax.random.normal(k6, (chan,), jnp.float32))
        eps = 1e-5
        scale = gamma / jnp.sqrt(rvar + eps)          # folded inference BN
        shift = beta - rmean * scale
        params.append(dict(
            w_hwio=jnp.transpose(w_oihw, (2, 3, 1, 0)),   # OIHW -> HWIO
            scale=scale.reshape(1, chan),
            shift=shift.reshape(1, chan),
            bias=b.reshape(1, out_c),
            ksize=ks, dilation=dil,
        ))
        chan = out_c
    out_chan = chan + in_channels    # res_type='concat'
    return params, out_chan


# Pure-JAX reference for validation (f32 end to end)
def ref_forward(x_nchw, params):
    x = jnp.transpose(x_nchw, (0, 2, 3, 1))
    pre = x
    h = pre
    for p in params:
        a = h * p['scale'].reshape(1, 1, 1, -1) + p['shift'].reshape(1, 1, 1, -1)
        a = jnp.where(a >= 0.0, a, LEAKY_SLOPE * a)
        h = lax.conv_general_dilated(
            a, p['w_hwio'], window_strides=(1, 1), padding='SAME',
            rhs_dilation=(p['dilation'], p['dilation']),
            dimension_numbers=('NHWC', 'HWIO', 'NHWC'),
        ) + p['bias'].reshape(1, 1, 1, -1)
    out = jnp.concatenate([pre, h], axis=-1)
    return jnp.transpose(out, (0, 3, 1, 2))


if __name__ == "__main__":
    key = jax.random.PRNGKey(0)
    kx, kp = jax.random.split(key)

    N, C, H, W = 2, 4, 16, 16
    net_cfg = [(8, 3), (8, 3), (16, 3)]

    x = jax.random.normal(kx, (N, C, H, W), jnp.float32)
    params, out_chan = init_make_layers_params(kp, C, net_cfg)
    fused = prepare_fused_params(params, C, H, W)

    fwd = jax.jit(lambda xx: make_layers_forward(xx, fused))
    y = jax.block_until_ready(fwd(x))
    assert y.shape == (N, out_chan, H, W), y.shape

    y_ref = ref_forward(x, params)
    err = float(jnp.max(jnp.abs(y - y_ref)))
    # Tolerance loosened vs the f32 version because matmul operands are bf16
    # (f32 accumulate); the pre/passthrough channels remain bit-exact.
    assert jnp.allclose(y, y_ref, atol=2e-2, rtol=2e-2), f"max abs err {err}"

    print("KERNEL_OK")
</pallas_src>

<mosaic_0001>
module attributes {stable_mosaic.version = 11 : i64} {
  func.func @kernel(%arg0: i32, %arg1: memref<1x16x64xf32, #tpu.memory_space<vmem>>, %arg2: memref<216x128xbf16, #tpu.memory_space<vmem>>, %arg3: memref<432x256xbf16, #tpu.memory_space<vmem>>, %arg4: memref<6x256xf32, #tpu.memory_space<vmem>>, %arg5: memref<1x16x320xf32, #tpu.memory_space<vmem>>, %arg6: memref<16x216xf32, #tpu.memory_space<vmem>>, %arg7: memref<16x432xf32, #tpu.memory_space<vmem>>) attributes {dimension_semantics = [#tpu.dimension_semantics<parallel>], iteration_bounds = array<i64: 2>, scalar_prefetch = 0 : i64, scratch_operands = 2 : i64, tpu.core_type = #tpu.core_type<tc>, window_params = [{transform_indices = @transform_0, window_bounds = array<i64: 1, 16, 64>}, {pipeline_mode = #tpu.pipeline_mode<synchronous>, transform_indices = @transform_1, window_bounds = array<i64: 216, 128>}, {pipeline_mode = #tpu.pipeline_mode<synchronous>, transform_indices = @transform_2, window_bounds = array<i64: 432, 256>}, {pipeline_mode = #tpu.pipeline_mode<synchronous>, transform_indices = @transform_3, window_bounds = array<i64: 6, 256>}, {transform_indices = @transform_4, window_bounds = array<i64: 1, 16, 320>}]} {
    %c0 = arith.constant 0 : index
    %c0_0 = arith.constant 0 : index
    %c0_1 = arith.constant 0 : index
    %0 = vector.load %arg1[%c0, %c0_0, %c0_1] : memref<1x16x64xf32, #tpu.memory_space<vmem>>, vector<1x16x64xf32>
    %1 = vector.shape_cast %0 : vector<1x16x64xf32> to vector<16x64xf32>
    %c0_2 = arith.constant 0 : index
    %c0_3 = arith.constant 0 : index
    %2 = vector.load %arg4[%c0_2, %c0_3] : memref<6x256xf32, #tpu.memory_space<vmem>>, vector<1x64xf32>
    %3 = vector.broadcast %2 : vector<1x64xf32> to vector<16x64xf32>
    %4 = arith.mulf %1, %3 : vector<16x64xf32>
    %c1 = arith.constant 1 : index
    %c0_4 = arith.constant 0 : index
    %5 = vector.load %arg4[%c1, %c0_4] : memref<6x256xf32, #tpu.memory_space<vmem>>, vector<1x64xf32>
    %6 = vector.broadcast %5 : vector<1x64xf32> to vector<16x64xf32>
    %7 = arith.addf %4, %6 : vector<16x64xf32>
    %cst = arith.constant 0.000000e+00 : f32
    %8 = vector.broadcast %cst : f32 to vector<16x64xf32>
    %9 = arith.cmpf oge, %7, %8 : vector<16x64xf32>
    %cst_5 = arith.constant 1.000000e-01 : f32
    %10 = vector.broadcast %cst_5 : f32 to vector<16x64xf32>
    %11 = arith.mulf %10, %7 : vector<16x64xf32>
    %12 = arith.select %9, %7, %11 : vector<16x64xi1>, vector<16x64xf32>
    %cst_6 = arith.constant 0.000000e+00 : f32
    %13 = vector.broadcast %cst_6 : f32 to vector<16x216xf32>
    %c0_7 = arith.constant 0 : index
    %c0_8 = arith.constant 0 : index
    %14 = vector.load %arg6[%c0_7, %c0_8] : memref<16x216xf32, #tpu.memory_space<vmem>>, vector<16x216xf32>
    tpu.vector_store %arg6[%c0_7, %c0_8], %13 {strides = array<i32>} : memref<16x216xf32, #tpu.memory_space<vmem>>, vector<16x216xf32>,
    %15 = vector.extract_strided_slice %12 {offsets = [0, 0], sizes = [15, 64], strides = [1, 1]} : vector<16x64xf32> to vector<15x64xf32>
    %c1_9 = arith.constant 1 : index
    %c4 = arith.constant 4 : index
    %16 = vector.load %arg6[%c1_9, %c4] : memref<16x216xf32, #tpu.memory_space<vmem>>, vector<15x64xf32>
    tpu.vector_store %arg6[%c1_9, %c4], %15 {strides = array<i32>} : memref<16x216xf32, #tpu.memory_space<vmem>>, vector<15x64xf32>,
    %c0_10 = arith.constant 0 : index
    %c76 = arith.constant 76 : index
    %17 = vector.load %arg6[%c0_10, %c76] : memref<16x216xf32, #tpu.memory_space<vmem>>, vector<16x64xf32>
    tpu.vector_store %arg6[%c0_10, %c76], %12 {strides = array<i32>} : memref<16x216xf32, #tpu.memory_space<vmem>>, vector<16x64xf32>,
    %18 = vector.extract_strided_slice %12 {offsets = [1, 0], sizes = [15, 64], strides = [1, 1]} : vector<16x64xf32> to vector<15x64xf32>
    %c0_11 = arith.constant 0 : index
    %c148 = arith.constant 148 : index
    %19 = vector.load %arg6[%c0_11, %c148] : memref<16x216xf32, #tpu.memory_space<vmem>>, vector<15x64xf32>
    tpu.vector_store %arg6[%c0_11, %c148], %18 {strides = array<i32>} : memref<16x216xf32, #tpu.memory_space<vmem>>, vector<15x64xf32>,
    %c0_12 = arith.constant 0 : index
    %c0_13 = arith.constant 0 : index
    %20 = vector.load %arg6[%c0_12, %c0_13] : memref<16x216xf32, #tpu.memory_space<vmem>>, vector<16x216xf32>
    %21 = arith.truncf %20 : vector<16x216xf32> to vector<16x216xbf16>
    %c0_14 = arith.constant 0 : index
    %c0_15 = arith.constant 0 : index
    %22 = vector.load %arg2[%c0_14, %c0_15] : memref<216x128xbf16, #tpu.memory_space<vmem>>, vector<216x128xbf16>
    %cst_16 = arith.constant dense<0.000000e+00> : vector<16x128xf32>
    %23 = tpu.matmul %21, %22, %cst_16 {dimension_numbers = #tpu.dot_dimension_numbers<[1], [0], [0], [1], [0, 0, 1, 1], [], []>} : vector<16x216xbf16>, vector<216x128xbf16>, vector<16x128xf32> -> vector<16x128xf32>
    %c2 = arith.constant 2 : index
    %c0_17 = arith.constant 0 : index
    %24 = vector.load %arg4[%c2, %c0_17] : memref<6x256xf32, #tpu.memory_space<vmem>>, vector<1x128xf32>
    %25 = vector.broadcast %24 : vector<1x128xf32> to vector<16x128xf32>
    %26 = arith.addf %23, %25 : vector<16x128xf32>
    %c3 = arith.constant 3 : index
    %c0_18 = arith.constant 0 : index
    %27 = vector.load %arg4[%c3, %c0_18] : memref<6x256xf32, #tpu.memory_space<vmem>>, vector<1x128xf32>
    %28 = vector.broadcast %27 : vector<1x128xf32> to vector<16x128xf32>
    %29 = arith.mulf %26, %28 : vector<16x128xf32>
    %c4_19 = arith.constant 4 : index
    %c0_20 = arith.constant 0 : index
    %30 = vector.load %arg4[%c4_19, %c0_20] : memref<6x256xf32, #tpu.memory_space<vmem>>, vector<1x128xf32>
    %31 = vector.broadcast %30 : vector<1x128xf32> to vector<16x128xf32>
    %32 = arith.addf %29, %31 : vector<16x128xf32>
    %cst_21 = arith.constant 0.000000e+00 : f32
    %33 = vector.broadcast %cst_21 : f32 to vector<16x128xf32>
    %34 = arith.cmpf oge, %32, %33 : vector<16x128xf32>
    %cst_22 = arith.constant 1.000000e-01 : f32
    %35 = vector.broadcast %cst_22 : f32 to vector<16x128xf32>
    %36 = arith.mulf %35, %32 : vector<16x128xf32>
    %37 = arith.select %34, %32, %36 : vector<16x128xi1>, vector<16x128xf32>
    %cst_23 = arith.constant 0.000000e+00 : f32
    %38 = vector.broadcast %cst_23 : f32 to vector<16x432xf32>
    %c0_24 = arith.constant 0 : index
    %c0_25 = arith.constant 0 : index
    %39 = vector.load %arg7[%c0_24, %c0_25] : memref<16x432xf32, #tpu.memory_space<vmem>>, vector<16x432xf32>
    tpu.vector_store %arg7[%c0_24, %c0_25], %38 {strides = array<i32>} : memref<16x432xf32, #tpu.memory_space<vmem>>, vector<16x432xf32>,
    %40 = vector.extract_strided_slice %37 {offsets = [0, 0], sizes = [15, 128], strides = [1, 1]} : vector<16x128xf32> to vector<15x128xf32>
    %c1_26 = arith.constant 1 : index
    %c8 = arith.constant 8 : index
    %41 = vector.load %arg7[%c1_26, %c8] : memref<16x432xf32, #tpu.memory_space<vmem>>, vector<15x128xf32>
    tpu.vector_store %arg7[%c1_26, %c8], %40 {strides = array<i32>} : memref<16x432xf32, #tpu.memory_space<vmem>>, vector<15x128xf32>,
    %c0_27 = arith.constant 0 : index
    %c152 = arith.constant 152 : index
    %42 = vector.load %arg7[%c0_27, %c152] : memref<16x432xf32, #tpu.memory_space<vmem>>, vector<16x128xf32>
    tpu.vector_store %arg7[%c0_27, %c152], %37 {strides = array<i32>} : memref<16x432xf32, #tpu.memory_space<vmem>>, vector<16x128xf32>,
    %43 = vector.extract_strided_slice %37 {offsets = [1, 0], sizes = [15, 128], strides = [1, 1]} : vector<16x128xf32> to vector<15x128xf32>
    %c0_28 = arith.constant 0 : index
    %c296 = arith.constant 296 : index
    %44 = vector.load %arg7[%c0_28, %c296] : memref<16x432xf32, #tpu.memory_space<vmem>>, vector<15x128xf32>
    tpu.vector_store %arg7[%c0_28, %c296], %43 {strides = array<i32>} : memref<16x432xf32, #tpu.memory_space<vmem>>, vector<15x128xf32>,
    %c0_29 = arith.constant 0 : index
    %c0_30 = arith.constant 0 : index
    %45 = vector.load %arg7[%c0_29, %c0_30] : memref<16x432xf32, #tpu.memory_space<vmem>>, vector<16x432xf32>
    %46 = arith.truncf %45 : vector<16x432xf32> to vector<16x432xbf16>
    %c0_31 = arith.constant 0 : index
    %c0_32 = arith.constant 0 : index
    %47 = vector.load %arg3[%c0_31, %c0_32] : memref<432x256xbf16, #tpu.memory_space<vmem>>, vector<432x256xbf16>
    %cst_33 = arith.constant dense<0.000000e+00> : vector<16x256xf32>
    %48 = tpu.matmul %46, %47, %cst_33 {dimension_numbers = #tpu.dot_dimension_numbers<[1], [0], [0], [1], [0, 0, 1, 1], [], []>} : vector<16x432xbf16>, vector<432x256xbf16>, vector<16x256xf32> -> vector<16x256xf32>
    %c5 = arith.constant 5 : index
    %c0_34 = arith.constant 0 : index
    %49 = vector.load %arg4[%c5, %c0_34] : memref<6x256xf32, #tpu.memory_space<vmem>>, vector<1x256xf32>
    %50 = vector.broadcast %49 : vector<1x256xf32> to vector<16x256xf32>
    %51 = arith.addf %48, %50 : vector<16x256xf32>
    %52 = tpu.concatenate %51, %1 in 1 : vector<16x256xf32>, vector<16x64xf32> -> vector<16x320xf32>
    %c0_35 = arith.constant 0 : index
    %c0_36 = arith.constant 0 : index
    %c0_37 = arith.constant 0 : index
    %53 = vector.load %arg5[%c0_35, %c0_36, %c0_37] : memref<1x16x320xf32, #tpu.memory_space<vmem>>, vector<1x16x320xf32>
    %54 = vector.shape_cast %53 : vector<1x16x320xf32> to vector<16x320xf32>
    %55 = vector.shape_cast %52 : vector<16x320xf32> to vector<1x16x320xf32>
    tpu.vector_store %arg5[%c0_35, %c0_36, %c0_37], %55 {strides = array<i32>} : memref<1x16x320xf32, #tpu.memory_space<vmem>>, vector<1x16x320xf32>,
    return
  }
  func.func @transform_0(%arg0: i32) -> (i32, i32, i32) {
    %c0_i32 = arith.constant 0 : i32
    %c0_i32_0 = arith.constant 0 : i32
    %c0_i32_1 = arith.constant 0 : i32
    return %arg0, %c0_i32, %c0_i32_0 : i32, i32, i32
  }
  func.func @transform_1(%arg0: i32) -> (i32, i32) {
    %c0_i32 = arith.constant 0 : i32
    %c0_i32_0 = arith.constant 0 : i32
    %c0_i32_1 = arith.constant 0 : i32
    return %c0_i32, %c0_i32_0 : i32, i32
  }
  func.func @transform_2(%arg0: i32) -> (i32, i32) {
    %c0_i32 = arith.constant 0 : i32
    %c0_i32_0 = arith.constant 0 : i32
    %c0_i32_1 = arith.constant 0 : i32
    return %c0_i32, %c0_i32_0 : i32, i32
  }
  func.func @transform_3(%arg0: i32) -> (i32, i32) {
    %c0_i32 = arith.constant 0 : i32
    %c0_i32_0 = arith.constant 0 : i32
    %c0_i32_1 = arith.constant 0 : i32
    return %c0_i32, %c0_i32_0 : i32, i32
  }
  func.func @transform_4(%arg0: i32) -> (i32, i32, i32) {
    %c0_i32 = arith.constant 0 : i32
    %c0_i32_0 = arith.constant 0 : i32
    %c0_i32_1 = arith.constant 0 : i32
    return %arg0, %c0_i32, %c0_i32_0 : i32, i32, i32
  }
}

</mosaic_0001>

<llo_original>
// kernel: _lambda_.1
$region0: #{_lambda_.1}
  #allocation0 [shape = 'u32[]', space=smem, size = 0x4, offset = 0x4, fixed_abs, tag = 'smem constant byte address 0x4 - core index']
  #allocation1 [shape = 'u32[144,128]{1,0:T(1,128)}', space=vmem, size = 0x12000, scoped, tag = 'internal scratch']
  #allocation2 [shape = 'f32[16,216]{1,0:T(8,128)}', space=vmem, size = 0x4000, scoped, tag = 'scratch operand']
  #allocation3 [shape = 'f32[16,432]{1,0:T(8,128)}', space=vmem, size = 0x8000, scoped, tag = 'scratch operand']
  %s0 = inlined_call_operand.vmem [shape: f32[2,16,64], index: 0, kind: input, shape index: {}]
  %s1 = inlined_call_operand.vmem [shape: bf16[216,128], index: 1, kind: input, shape index: {}]
  %s2 = inlined_call_operand.hbm [shape: bf16[432,256], index: 2, kind: input, shape index: {}]
  %s3 = inlined_call_operand.vmem [shape: f32[6,256], index: 3, kind: input, shape index: {}]
  %s4 = inlined_call_operand.vmem [shape: f32[2,16,320], index: 4, kind: output, shape index: {}]
  %s5 = sld [smem:[#allocation0]]
  $region53: #{_lambda_.1} parent=0
    _
  %s7 = ssub.s32 1, %s5
  %s8 = scalar_select 0, %s7, %s5
  $region1: #{_lambda_.1} parent=0
    #allocation4 [shape = 'u8[221184]{0}', space=vmem, size = 0x36000, scoped, tag = 'input window, operand 2, single buffered']
    #allocation5 [shape = 's32[2]{0}', space=sflag, size = 0x8, scoped, tag = 'scoped memory for _lambda_.1']
    %9 = vsyncpa [#allocation5], 0
    loop: start=0, step=1, limit=4
    $region2: #{_lambda_.1} parent=1 // loop_pre_header
      _
    $region3: #{_lambda_.1} parent=1 // loop_header
      %s11 = sphi 0, %s15
      %p12 = scmp.ge.s32.totalorder %s11, 4
      %s21 = sphi 0, %s23
      %s24 = sphi 0, %s21
      %s25 = sphi 0, %s24
      %s41 = sphi 0, %s25
      %s45 = sphi 0, %s45
      %s47 = sphi 0, %s45
      %s48 = sphi 0, %s47
      %s62 = sphi 0, %s48
      %s66 = sphi 0, %s66
      %s68 = sphi 0, %s66
      %s69 = sphi 0, %s68
      %s83 = sphi 0, %s69
      %s87 = sphi 0, %s87
      %s89 = sphi 0, %s87
      %s90 = sphi 0, %s89
      %s104 = sphi 0, %s90
      %s110 = sphi 0, %s112
      %s113 = sphi 0, %s110
      %s114 = sphi 0, %s113
      %s130 = sphi 0, %s114
    $region4: #{_lambda_.1} parent=1 // loop_header_branch
      %14 = sbr.rel (%p12) target = $region8
    $region5: #{_lambda_.1} parent=1 // loop_body
      %s16 = ssub.s32 %s11, 1
      %s17 = ssub.s32 %s11, 2
      %s18 = sadd.s32 %s11, 1
      %s19 = ssub.s32 %s11, %s18
      %p20 = scmp.eq.s32.totalorder %s19, 0
      %s22 = sadd.s32 %s21, 1
      %s23 = scalar_select %p20, %s21, %s22
      %p26 = pneg %p20
      %p27 = scmp.eq.s32.totalorder %s11, 1
      %p28 = por %p26, %p27
      %p29 = scmp.ne.s32.totalorder %s21, %s24
      %p30 = scmp.eq.s32.totalorder %s11, 0
      %p31 = por %p29, %p30
      %p32 = scmp.ne.s32.totalorder %s21, %s24
      %p33 = scmp.eq.s32.totalorder %s16, 1
      %p34 = por %p32, %p33
      %p35 = scmp.ne.s32.totalorder %s24, %s25
      %p36 = scmp.eq.s32.totalorder %s16, 0
      %p37 = por %p35, %p36
      %p38 = scmp.ne.s32.totalorder %s24, %s25
      %p39 = scmp.eq.s32.totalorder %s17, 1
      %p40 = por %p38, %p39
      %p42 = scmp.ne.s32.totalorder %s25, %s41
      %p43 = scmp.eq.s32.totalorder %s17, 0
      %p44 = por %p42, %p43
      %s46 = sadd.s32 %s45, 1
      %p49 = scmp.eq.s32.totalorder %s11, 1
      %p50 = scmp.ne.s32.totalorder %s45, %s47
      %p51 = scmp.eq.s32.totalorder %s11, 0
      %p52 = por %p50, %p51
      %p53 = scmp.ne.s32.totalorder %s45, %s47
      %p54 = scmp.eq.s32.totalorder %s16, 1
      %p55 = por %p53, %p54
      %p56 = scmp.ne.s32.totalorder %s47, %s48
      %p57 = scmp.eq.s32.totalorder %s16, 0
      %p58 = por %p56, %p57
      %p59 = scmp.ne.s32.totalorder %s47, %s48
      %p60 = scmp.eq.s32.totalorder %s17, 1
      %p61 = por %p59, %p60
      %p63 = scmp.ne.s32.totalorder %s48, %s62
      %p64 = scmp.eq.s32.totalorder %s17, 0
      %p65 = por %p63, %p64
      %s67 = sadd.s32 %s66, 1
      %p70 = scmp.eq.s32.totalorder %s11, 1
      %p71 = scmp.ne.s32.totalorder %s66, %s68
      %p72 = scmp.eq.s32.totalorder %s11, 0
      %p73 = por %p71, %p72
      %p74 = scmp.ne.s32.totalorder %s66, %s68
      %p75 = scmp.eq.s32.totalorder %s16, 1
      %p76 = por %p74, %p75
      %p77 = scmp.ne.s32.totalorder %s68, %s69
      %p78 = scmp.eq.s32.totalorder %s16, 0
      %p79 = por %p77, %p78
      %p80 = scmp.ne.s32.totalorder %s68, %s69
      %p81 = scmp.eq.s32.totalorder %s17, 1
      %p82 = por %p80, %p81
      %p84 = scmp.ne.s32.totalorder %s69, %s83
      %p85 = scmp.eq.s32.totalorder %s17, 0
      %p86 = por %p84, %p85
      %s88 = sadd.s32 %s87, 1
      %p91 = scmp.eq.s32.totalorder %s11, 1
      %p92 = scmp.ne.s32.totalorder %s87, %s89
      %p93 = scmp.eq.s32.totalorder %s11, 0
      %p94 = por %p92, %p93
      %p95 = scmp.ne.s32.totalorder %s87, %s89
      %p96 = scmp.eq.s32.totalorder %s16, 1
      %p97 = por %p95, %p96
      %p98 = scmp.ne.s32.totalorder %s89, %s90
      %p99 = scmp.eq.s32.totalorder %s16, 0
      %p100 = por %p98, %p99
      %p101 = scmp.ne.s32.totalorder %s89, %s90
      %p102 = scmp.eq.s32.totalorder %s17, 1
      %p103 = por %p101, %p102
      %p105 = scmp.ne.s32.totalorder %s90, %s104
      %p106 = scmp.eq.s32.totalorder %s17, 0
      %p107 = por %p105, %p106
      %s108 = ssub.s32 %s11, %s18
      %p109 = scmp.eq.s32.totalorder %s108, 0
      %s111 = sadd.s32 %s110, 1
      %s112 = scalar_select %p109, %s110, %s111
      %p115 = pneg %p109
      %p116 = scmp.eq.s32.totalorder %s11, 1
      %p117 = por %p115, %p116
      %p118 = scmp.ne.s32.totalorder %s110, %s113
      %p119 = scmp.eq.s32.totalorder %s11, 0
      %p120 = por %p118, %p119
      %p121 = scmp.ne.s32.totalorder %s110, %s113
      %p122 = scmp.eq.s32.totalorder %s16, 1
      %p123 = por %p121, %p122
      %p124 = scmp.ne.s32.totalorder %s113, %s114
      %p125 = scmp.eq.s32.totalorder %s16, 0
      %p126 = por %p124, %p125
      %p127 = scmp.ne.s32.totalorder %s113, %s114
      %p128 = scmp.eq.s32.totalorder %s17, 1
      %p129 = por %p127, %p128
      %p131 = scmp.ne.s32.totalorder %s114, %s130
      %p132 = scmp.eq.s32.totalorder %s17, 0
      %p133 = por %p131, %p132
      %p134 = scmp.le.s32.totalorder 1, %s11
      %p135 = scmp.lt.s32.totalorder %s11, 3
      %p136 = pnand %p134, %p135
      %p137 = pneg %p136
      // Predicated region
      $region9: #{_lambda_.1} parent=5 // pred_check
        _
      $region10: #{_lambda_.1} parent=5 // pred_check_branch
        %139 = sbr.rel (%p136) target = $region12
      $region11: #{_lambda_.1} parent=5 // pred_region
        %s140 = ssub.s32 %s11, 1
        // Predicated region
        $region13: #{_lambda_.1} parent=11 // pred_check
          %p141 = pneg %p58
        $region14: #{_lambda_.1} parent=11 // pred_check_branch
          %143 = sbr.rel (%p141) target = $region16
        $region15: #{_lambda_.1} parent=11 // pred_region
          _
        $region16: #{_lambda_.1} parent=11 // pred_fallthru
          _
        // Predicated region
        $region17: #{_lambda_.1} parent=11 // pred_check
          %p144 = pneg %p79
        $region18: #{_lambda_.1} parent=11 // pred_check_branch
          %146 = sbr.rel (%p144) target = $region20
        $region19: #{_lambda_.1} parent=11 // pred_region
          %s148 = ssub.s32 6912, 6912
          %149 = vsyncadd [#allocation5], %s148
          %s150 = sshll.u32 [#allocation4], 4
          %s151 = int_to_ptr.vmem [resolvable:$true] %s150
          %156 = dma.hbm_to_vmem [thread:$0]  %s2, 6912, %s151, [#allocation5], 128, 128, 8
        $region20: #{_lambda_.1} parent=11 // pred_fallthru
          _
        // Predicated region
        $region21: #{_lambda_.1} parent=11 // pred_check
          %p157 = pneg %p100
        $region22: #{_lambda_.1} parent=11 // pred_check_branch
          %159 = sbr.rel (%p157) target = $region24
        $region23: #{_lambda_.1} parent=11 // pred_region
          _
        $region24: #{_lambda_.1} parent=11 // pred_fallthru
          _
      $region12: #{_lambda_.1} parent=5 // pred_fallthru
        _
      %p160 = scmp.lt.s32.totalorder %s11, 2
      // Predicated region
      $region25: #{_lambda_.1} parent=5 // pred_check
        %p161 = pneg %p160
      $region26: #{_lambda_.1} parent=5 // pred_check_branch
        %163 = sbr.rel (%p161) target = $region28
      $region27: #{_lambda_.1} parent=5 // pred_region
        // Predicated region
        $region29: #{_lambda_.1} parent=27 // pred_check
          %p164 = pneg %p31
        $region30: #{_lambda_.1} parent=27 // pred_check_branch
          %166 = sbr.rel (%p164) target = $region32
        $region31: #{_lambda_.1} parent=27 // pred_region
          %p167 = scmp.lt.s32.totalorder %s11, 1
          %s168 = scalar_select %p167, %s11, 1
          %s169 = smul.addr %s168, 2
          %s170 = smul.addr %s169, 8
          %s171 = scalar_lea.vmem %s0, %s170
        $region32: #{_lambda_.1} parent=27 // pred_fallthru
          _
      $region28: #{_lambda_.1} parent=5 // pred_fallthru
        _
      %p172 = scmp.le.s32.totalorder 1, %s11
      %p173 = scmp.lt.s32.totalorder %s11, 3
      %p174 = pnand %p172, %p173
      %p175 = pneg %p174
      // Predicated region
      $region33: #{_lambda_.1} parent=5 // pred_check
        _
      $region34: #{_lambda_.1} parent=5 // pred_check_branch
        %177 = sbr.rel (%p174) target = $region36
      $region35: #{_lambda_.1} parent=5 // pred_region
        %s178 = ssub.s32 %s11, 1
        // Predicated region
        $region37: #{_lambda_.1} parent=35 // pred_check
          %p179 = pneg %p79
        $region38: #{_lambda_.1} parent=35 // pred_check_branch
          %181 = sbr.rel (%p179) target = $region40
        $region39: #{_lambda_.1} parent=35 // pred_region
          %182 = dma.done [#allocation5], 6912
        $region40: #{_lambda_.1} parent=35 // pred_fallthru
          _
        %p183 = scmp.lt.s32.totalorder %s16, 1
        %s184 = scalar_select %p183, %s16, 1
        %s185 = smul.addr %s184, 2
        %s186 = smul.addr %s185, 8
        %s187 = scalar_lea.vmem %s0, %s186
        %p188 = pneg %p37
        %p189 = pneg %p34
        %p190 = pneg %p58
        %p191 = pneg %p55
        %p192 = pneg %p79
        %p193 = pneg %p76
        %p194 = pneg %p100
        %p195 = pneg %p97
        %p196 = pneg %p126
        %p197 = pneg %p123
        %p198 = scmp.lt.s32.totalorder %s16, 1
        %s199 = scalar_select %p198, %s16, 1
        %s200 = smul.addr %s199, 6
        %s201 = smul.addr %s200, 8
        %s202 = scalar_lea.vmem %s4, %s201
        %p203 = scmp.lt.s32.totalorder %s16, 1
        %s204 = scalar_select %p203, %s16, 1
        %s205 = smul.addr %s204, 2
        %s206 = smul.addr %s205, 8
        %s207 = scalar_lea.vmem %s0, %s206
        %p208 = scmp.lt.s32.totalorder %s16, 1
        %s209 = scalar_select %p208, %s16, 1
        %s210 = smul.addr %s209, 6
        %s211 = smul.addr %s210, 8
        %s212 = scalar_lea.vmem %s4, %s211
        %v214 = vld [vmem:[%s207] sm:$0xff]
        %v215 = vld [vmem:[%s207 + $0x8] sm:$0xff]
        %v216 = vld [vmem:[%s3] ss:$0 sm:$0xff]
        %v217 = vmul.f32 %v214, %v216
        %v218 = vmul.f32 %v215, %v216
        %v219 = vld [vmem:[%s3 + $0x1] ss:$0 sm:$0xff]
        %v220 = vadd.f32 %v217, %v219
        %v221 = vadd.f32 %v218, %v219
        %vm222 = vcmp.ge.f32.partialorder %v220, 0.0
        %vm223 = vcmp.ge.f32.partialorder %v221, 0.0
        %v224 = vmul.f32 %v220, 0.1
        %v225 = vmul.f32 %v221, 0.1
        %v226 = vsel %vm222, %v220, %v224
        %v227 = vsel %vm223, %v221, %v225
        %228 = vst [vmem:[#allocation2] sm:$0xff] 0.0
        %vm229 = vcmask 719872
        %230 = vst.msk [vmem:[#allocation2 + $0x8] sm:$0xff] %vm229, 0.0
        %231 = vst [vmem:[#allocation2 + $0x10] sm:$0xff] 0.0
        %232 = vst.msk [vmem:[#allocation2 + $0x18] sm:$0xff] %vm229, 0.0
        %vm235 = vcmask 1040384
        %v236 = vrot.slane %v226, 7
        %v237 = vrot.slane %v227, 7
        %v238 = vsel %vm235, %v236, %v237
        %239 = vrot.lane.b32.xlu0 %v236, 4
        %v240 = vpop.permute.xlu0 %239
        %241 = vrot.lane.b32.xlu0 %v238, 4
        %v242 = vpop.permute.xlu0 %241
        %vm245 = vcmask 556065
        %246 = vst.msk [vmem:[#allocation2] sm:$0xfe] %vm245, %v240
        %vm247 = vcmask 556064
        %248 = vst.msk [vmem:[#allocation2 + $0x10] sm:$0xff] %vm247, %v242
        %249 = vrot.lane.b32.xlu0 %v226, 76
        %v250 = vpop.permute.xlu0 %249
        %251 = vrot.lane.b32.xlu0 %v227, 76
        %v252 = vpop.permute.xlu0 %251
        %vm255 = vcmask 1048160
        %256 = vst.msk [vmem:[#allocation2] sm:$0xff] %vm255, %v250
        %vm257 = vcmask 97280
        %258 = vst.msk [vmem:[#allocation2 + $0x8] sm:$0xff] %vm257, %v250
        %259 = vst.msk [vmem:[#allocation2 + $0x10] sm:$0xff] %vm255, %v252
        %260 = vst.msk [vmem:[#allocation2 + $0x18] sm:$0xff] %vm257, %v252
        %vm261 = vcmask 1046528
        %v262 = vrot.slane %v226, 1
        %v263 = vrot.slane %v227, 1
        %v264 = vsel %vm261, %v262, %v263
        %265 = vrot.lane.b32.xlu0 %v264, 20
        %v266 = vpop.permute.xlu0 %265
        %267 = vrot.lane.b32.xlu0 %v263, 20
        %v268 = vpop.permute.xlu0 %267
        %vm271 = vcmask 687264
        %272 = vst.msk [vmem:[#allocation2 + $0x8] sm:$0xff] %vm271, %v266
        %vm273 = vcmask 686240
        %274 = vst.msk [vmem:[#allocation2 + $0x18] sm:$0x7f] %vm273, %v268
        %v275 = vld [vmem:[#allocation2] sm:$0xff]
        %v276 = vld [vmem:[#allocation2 + $0x8] sm:$0xff]
        %v277 = vld [vmem:[#allocation2 + $0x10] sm:$0xff]
        %v278 = vld [vmem:[#allocation2 + $0x18] sm:$0xff]
        %v279 = vpack.c.bf16 %v277, %v275
        %v280 = vpack.c.bf16 %v278, %v276
        %v281 = vld [vmem:[%s1] sm:$0xf]
        %v282 = vld [vmem:[%s1 + $0x4] sm:$0xf]
        %v283 = vld [vmem:[%s1 + $0x8] sm:$0xf]
        %v284 = vld [vmem:[%s1 + $0xc] sm:$0xf]
        %v285 = vld [vmem:[%s1 + $0x10] sm:$0xf]
        %v286 = vld [vmem:[%s1 + $0x14] sm:$0xf]
        %v287 = vld [vmem:[%s1 + $0x18] sm:$0xf]
        %v288 = vld [vmem:[%s1 + $0x1c] sm:$0xf]
        %v289 = vld [vmem:[%s1 + $0x20] sm:$0xf]
        %v290 = vld [vmem:[%s1 + $0x24] sm:$0xf]
        %v291 = vld [vmem:[%s1 + $0x28] sm:$0xf]
        %v292 = vld [vmem:[%s1 + $0x2c] sm:$0xf]
        %v293 = vld [vmem:[%s1 + $0x30] sm:$0xf]
        %v294 = vld [vmem:[%s1 + $0x34] sm:$0xf]
        %v295 = vld [vmem:[%s1 + $0x38] sm:$0xf]
        %v296 = vld [vmem:[%s1 + $0x3c] sm:$0xf]
        %v297 = vld [vmem:[%s1 + $0x40] sm:$0xf]
        %v298 = vld [vmem:[%s1 + $0x44] sm:$0xf]
        %v299 = vld [vmem:[%s1 + $0x48] sm:$0xf]
        %v300 = vld [vmem:[%s1 + $0x4c] sm:$0xf]
        %v301 = vld [vmem:[%s1 + $0x50] sm:$0xf]
        %v302 = vld [vmem:[%s1 + $0x54] sm:$0xf]
        %v303 = vld [vmem:[%s1 + $0x58] sm:$0xf]
        %v304 = vld [vmem:[%s1 + $0x5c] sm:$0xf]
        %v305 = vld [vmem:[%s1 + $0x60] sm:$0xf]
        %v306 = vld [vmem:[%s1 + $0x64] sm:$0xf]
        %v307 = vld [vmem:[%s1 + $0x68] sm:$0xf]
        %v308 = vld [vmem:[%s3 + $0x2] ss:$0 sm:$0xff]
        %v336 = vunpack.c.l.b16 %v281
        %v337 = vunpack.c.l.b16 %v282
        %v338 = vunpack.c.l.b16 %v283
        %v339 = vunpack.c.l.b16 %v284
        %v340 = vunpack.c.l.b16 %v285
        %v341 = vunpack.c.l.b16 %v286
        %v342 = vunpack.c.l.b16 %v287
        %v343 = vunpack.c.l.b16 %v288
        %v344 = vunpack.c.l.b16 %v289
        %v345 = vunpack.c.l.b16 %v290
        %v346 = vunpack.c.l.b16 %v291
        %v347 = vunpack.c.l.b16 %v292
        %v348 = vunpack.c.l.b16 %v293
        %v349 = vunpack.c.l.b16 %v294
        %v350 = vunpack.c.l.b16 %v295
        %v351 = vunpack.c.l.b16 %v296
        %v352 = vunpack.c.l.b16 %v297
        %v353 = vunpack.c.l.b16 %v298
        %v354 = vunpack.c.l.b16 %v299
        %v355 = vunpack.c.l.b16 %v300
        %v356 = vunpack.c.l.b16 %v301
        %v357 = vunpack.c.l.b16 %v302
        %v358 = vunpack.c.l.b16 %v303
        %v359 = vunpack.c.l.b16 %v304
        %v360 = vunpack.c.l.b16 %v305
        %v361 = vunpack.c.l.b16 %v306
        %v362 = vunpack.c.l.b16 %v307
        %v363 = vpack.c.b16 %v337, %v336
        %v364 = vpack.c.b16 %v339, %v338
        %v365 = vpack.c.b16 %v341, %v340
        %v366 = vpack.c.b16 %v343, %v342
        %v367 = vpack.c.b16 %v345, %v344
        %v368 = vpack.c.b16 %v347, %v346
        %v369 = vpack.c.b16 %v349, %v348
        %v370 = vpack.c.b16 %v351, %v350
        %v371 = vpack.c.b16 %v353, %v352
        %v372 = vpack.c.b16 %v355, %v354
        %v373 = vpack.c.b16 %v357, %v356
        %v374 = vpack.c.b16 %v359, %v358
        %v375 = vpack.c.b16 %v361, %v360
        %v376 = vpack.c.b16 %v362, %v362
        %v391 = vsel %vm229, %v280, 0
        %vm393 = vcmask 1043456
        %v395 = vsel %vm393, %v376, 0
        %397 = vmatprep.subr.bf16.mxu0 0
        %398 = vmatpush1.bf16.msra.mxu0 %v370
        %399 = vmatprep.subr.bf16.mxu0 0
        %400 = vmatpush1.bf16.msra.mxu0 %v369
        %401 = vmatprep.subr.bf16.mxu0 0
        %402 = vmatpush1.bf16.msra.mxu0 %v368
        %403 = vmatprep.subr.bf16.mxu0 0
        %404 = vmatpush1.bf16.msra.mxu0 %v367
        %405 = vmatprep.subr.bf16.mxu0 0
        %406 = vmatpush1.bf16.msra.mxu0 %v366
        %407 = vmatprep.subr.bf16.mxu0 0
        %408 = vmatpush1.bf16.msra.mxu0 %v365
        %409 = vmatprep.subr.bf16.mxu0 0
        %410 = vmatpush1.bf16.msra.mxu0 %v364
        %411 = vmatprep.subr.bf16.mxu0 0
        %412 = vmatpush1.bf16.msra.mxu0 %v363
        %413 = vmatprep.subr.bf16.mxu0 0
        %414 = vmatpush2.bf16.msra.mxu0 0
        %415 = vmatprep.subr.bf16.mxu0 0
        %416 = vmatpush2.bf16.msra.mxu0 0
        %417 = vmatprep.subr.bf16.mxu0 0
        %418 = vmatpush2.bf16.msra.mxu0 %v395
        %419 = vmatprep.subr.bf16.mxu0 0
        %420 = vmatpush2.bf16.msra.mxu0 %v375
        %421 = vmatprep.subr.bf16.mxu0 0
        %422 = vmatpush2.bf16.msra.mxu0 %v374
        %423 = vmatprep.subr.bf16.mxu0 0
        %424 = vmatpush2.bf16.msra.mxu0 %v373
        %425 = vmatprep.subr.bf16.mxu0 0
        %426 = vmatpush2.bf16.msra.mxu0 %v372
        %427 = vmatprep.subr.bf16.mxu0 0
        %428 = vmatpush2.bf16.msra.mxu0 %v371
        %429 = vmatprep.mubr.bf16.mxu0 %v391
        %430 = vmatmul.mubr.bf16.gmra.mxu0 %v279
        %v431 = vpop.f32.mrf.mxu0
        %v432 = vadd.f32 %v308, %v431
        %v433 = vpop.f32.mrf.mxu0
        %v434 = vpop.f32.mrf.mxu0
        %v435 = vadd.f32 %v308, %v434
        %v436 = vpop.f32.mrf.mxu0
        %437 = vdwg.mxu0
        %v438 = vld [vmem:[%s3 + $0x3] ss:$0 sm:$0xff]
        %v439 = vmul.f32 %v432, %v438
        %v440 = vmul.f32 %v435, %v438
        %v441 = vld [vmem:[%s3 + $0x4] ss:$0 sm:$0xff]
        %v442 = vadd.f32 %v439, %v441
        %v443 = vadd.f32 %v440, %v441
        %vm444 = vcmp.ge.f32.partialorder %v442, 0.0
        %vm445 = vcmp.ge.f32.partialorder %v443, 0.0
        %v446 = vmul.f32 %v442, 0.1
        %v447 = vmul.f32 %v443, 0.1
        %v448 = vsel %vm444, %v442, %v446
        %v449 = vsel %vm445, %v443, %v447
        %450 = vst [vmem:[#allocation3] sm:$0xff] 0.0
        %451 = vst [vmem:[#allocation3 + $0x8] sm:$0xff] 0.0
        %452 = vst [vmem:[#allocation3 + $0x10] sm:$0xff] 0.0
        %vm453 = vcmask 392192
        %454 = vst.msk [vmem:[#allocation3 + $0x18] sm:$0xff] %vm453, 0.0
        %455 = vst [vmem:[#allocation3 + $0x20] sm:$0xff] 0.0
        %456 = vst [vmem:[#allocation3 + $0x28] sm:$0xff] 0.0
        %457 = vst [vmem:[#allocation3 + $0x30] sm:$0xff] 0.0
        %458 = vst.msk [vmem:[#allocation3 + $0x38] sm:$0xff] %vm453, 0.0
        %v461 = vrot.slane %v448, 7
        %v462 = vrot.slane %v449, 7
        %v463 = vsel %vm235, %v461, %v462
        %464 = vrot.lane.b32.xlu0 %v461, 8
        %v465 = vpop.permute.xlu0 %464
        %466 = vrot.lane.b32.xlu0 %v463, 8
        %v467 = vpop.permute.xlu0 %466
        %vm470 = vcmask 1047617
        %471 = vst.msk [vmem:[#allocation3] sm:$0xfe] %vm470, %v465
        %vm472 = vcmask 64513
        %473 = vst.msk [vmem:[#allocation3 + $0x8] sm:$0xfe] %vm472, %v465
        %vm474 = vcmask 1047616
        %475 = vst.msk [vmem:[#allocation3 + $0x20] sm:$0xff] %vm474, %v467
        %vm476 = vcmask 64512
        %477 = vst.msk [vmem:[#allocation3 + $0x28] sm:$0xff] %vm476, %v467
        %478 = vrot.lane.b32.xlu0 %v448, 24
        %v479 = vpop.permute.xlu0 %478
        %480 = vrot.lane.b32.xlu0 %v449, 24
        %v481 = vpop.permute.xlu0 %480
        %vm484 = vcmask 1047744
        %485 = vst.msk [vmem:[#allocation3 + $0x8] sm:$0xff] %vm484, %v479
        %vm486 = vcmask 195584
        %487 = vst.msk [vmem:[#allocation3 + $0x10] sm:$0xff] %vm486, %v479
        %488 = vst.msk [vmem:[#allocation3 + $0x28] sm:$0xff] %vm484, %v481
        %489 = vst.msk [vmem:[#allocation3 + $0x30] sm:$0xff] %vm486, %v481
        %v490 = vrot.slane %v448, 1
        %v491 = vrot.slane %v449, 1
        %v492 = vsel %vm261, %v490, %v491
        %493 = vrot.lane.b32.xlu0 %v492, 40
        %v494 = vpop.permute.xlu0 %493
        %495 = vrot.lane.b32.xlu0 %v491, 40
        %v496 = vpop.permute.xlu0 %495
        %vm499 = vcmask 1047872
        %500 = vst.msk [vmem:[#allocation3 + $0x10] sm:$0xff] %vm499, %v494
        %vm501 = vcmask 326656
        %502 = vst.msk [vmem:[#allocation3 + $0x18] sm:$0xff] %vm501, %v494
        %vm503 = vcmask 1046848
        %504 = vst.msk [vmem:[#allocation3 + $0x30] sm:$0x7f] %vm503, %v496
        %vm505 = vcmask 325632
        %506 = vst.msk [vmem:[#allocation3 + $0x38] sm:$0x7f] %vm505, %v496
        %v507 = vld [vmem:[#allocation3] sm:$0xff]
        %v508 = vld [vmem:[#allocation3 + $0x8] sm:$0xff]
        %v509 = vld [vmem:[#allocation3 + $0x10] sm:$0xff]
        %v510 = vld [vmem:[#allocation3 + $0x18] sm:$0xff]
        %v511 = vld [vmem:[#allocation3 + $0x20] sm:$0xff]
        %v512 = vld [vmem:[#allocation3 + $0x28] sm:$0xff]
        %v513 = vld [vmem:[#allocation3 + $0x30] sm:$0xff]
        %v514 = vld [vmem:[#allocation3 + $0x38] sm:$0xff]
        %v515 = vpack.c.bf16 %v511, %v507
        %v516 = vpack.c.bf16 %v512, %v508
        %v517 = vpack.c.bf16 %v513, %v509
        %v518 = vpack.c.bf16 %v514, %v510
        %v519 = vld [vmem:[#allocation4] sm:$0xff]
        %v520 = vld [vmem:[#allocation4 + $0x8] sm:$0xff]
        %v521 = vld [vmem:[#allocation4 + $0x10] sm:$0xff]
        %v522 = vld [vmem:[#allocation4 + $0x18] sm:$0xff]
        %v523 = vld [vmem:[#allocation4 + $0x20] sm:$0xff]
        %v524 = vld [vmem:[#allocation4 + $0x28] sm:$0xff]
        %v525 = vld [vmem:[#allocation4 + $0x30] sm:$0xff]
        %v526 = vld [vmem:[#allocation4 + $0x38] sm:$0xff]
        %v527 = vld [vmem:[#allocation4 + $0x40] sm:$0xff]
        %v528 = vld [vmem:[#allocation4 + $0x48] sm:$0xff]
        %v529 = vld [vmem:[#allocation4 + $0x50] sm:$0xff]
        %v530 = vld [vmem:[#allocation4 + $0x58] sm:$0xff]
        %v531 = vld [vmem:[#allocation4 + $0x60] sm:$0xff]
        %v532 = vld [vmem:[#allocation4 + $0x68] sm:$0xff]
        %v533 = vld [vmem:[#allocation4 + $0x70] sm:$0xff]
        %v534 = vld [vmem:[#allocation4 + $0x78] sm:$0xff]
        %v535 = vld [vmem:[#allocation4 + $0x80] sm:$0xff]
        %v536 = vld [vmem:[#allocation4 + $0x88] sm:$0xff]
        %v537 = vld [vmem:[#allocation4 + $0x90] sm:$0xff]
        %v538 = vld [vmem:[#allocation4 + $0x98] sm:$0xff]
        %v539 = vld [vmem:[#allocation4 + $0xa0] sm:$0xff]
        %v540 = vld [vmem:[#allocation4 + $0xa8] sm:$0xff]
        %v541 = vld [vmem:[#allocation4 + $0xb0] sm:$0xff]
        %v542 = vld [vmem:[#allocation4 + $0xb8] sm:$0xff]
        %v543 = vld [vmem:[#allocation4 + $0xc0] sm:$0xff]
        %v544 = vld [vmem:[#allocation4 + $0xc8] sm:$0xff]
        %v545 = vld [vmem:[#allocation4 + $0xd0] sm:$0xff]
        %v546 = vld [vmem:[#allocation4 + $0xd8] sm:$0xff]
        %v547 = vld [vmem:[#allocation4 + $0xe0] sm:$0xff]
        %v548 = vld [vmem:[#allocation4 + $0xe8] sm:$0xff]
        %v549 = vld [vmem:[#allocation4 + $0xf0] sm:$0xff]
        %v550 = vld [vmem:[#allocation4 + $0xf8] sm:$0xff]
        %v551 = vld [vmem:[#allocation4 + $0x100] sm:$0xff]
        %v552 = vld [vmem:[#allocation4 + $0x108] sm:$0xff]
        %v553 = vld [vmem:[#allocation4 + $0x110] sm:$0xff]
        %v554 = vld [vmem:[#allocation4 + $0x118] sm:$0xff]
        %v555 = vld [vmem:[#allocation4 + $0x120] sm:$0xff]
        %v556 = vld [vmem:[#allocation4 + $0x128] sm:$0xff]
        %v557 = vld [vmem:[#allocation4 + $0x130] sm:$0xff]
        %v558 = vld [vmem:[#allocation4 + $0x138] sm:$0xff]
        %v559 = vld [vmem:[#allocation4 + $0x140] sm:$0xff]
        %v560 = vld [vmem:[#allocation4 + $0x148] sm:$0xff]
        %v561 = vld [vmem:[#allocation4 + $0x150] sm:$0xff]
        %v562 = vld [vmem:[#allocation4 + $0x158] sm:$0xff]
        %v563 = vld [vmem:[#allocation4 + $0x160] sm:$0xff]
        %v564 = vld [vmem:[#allocation4 + $0x168] sm:$0xff]
        %v565 = vld [vmem:[#allocation4 + $0x170] sm:$0xff]
        %v566 = vld [vmem:[#allocation4 + $0x178] sm:$0xff]
        %v567 = vld [vmem:[#allocation4 + $0x180] sm:$0xff]
        %v568 = vld [vmem:[#allocation4 + $0x188] sm:$0xff]
        %v569 = vld [vmem:[#allocation4 + $0x190] sm:$0xff]
        %v570 = vld [vmem:[#allocation4 + $0x198] sm:$0xff]
        %v571 = vld [vmem:[#allocation4 + $0x1a0] sm:$0xff]
        %v572 = vld [vmem:[#allocation4 + $0x1a8] sm:$0xff]
        %s573 = scalar_lea.vmem %s3, 5
        %v574 = vld [vmem:[%s573] ss:$8 sm:$0x3]
        %v576 = vlaneseq
        %v577 = vshrl.u32 %v576, 7
        %v578 = vsub.s32 0, %v577
        %v579 = vrot.slane %v574, %v578
        %v580 = vlaneseq
        %v581 = vshrl.u32 %v580, 7
        %v582 = vsub.s32 1, %v581
        %v583 = vrot.slane %v574, %v582
        %v640 = vunpack.c.l.b16 %v519
        %v641 = vunpack.c.h.b16 %v519
        %v642 = vunpack.c.l.b16 %v520
        %v643 = vunpack.c.h.b16 %v520
        %v644 = vunpack.c.l.b16 %v521
        %v645 = vunpack.c.h.b16 %v521
        %v646 = vunpack.c.l.b16 %v522
        %v647 = vunpack.c.h.b16 %v522
        %v648 = vunpack.c.l.b16 %v523
        %v649 = vunpack.c.h.b16 %v523
        %v650 = vunpack.c.l.b16 %v524
        %v651 = vunpack.c.h.b16 %v524
        %v652 = vunpack.c.l.b16 %v525
        %v653 = vunpack.c.h.b16 %v525
        %v654 = vunpack.c.l.b16 %v526
        %v655 = vunpack.c.h.b16 %v526
        %v656 = vunpack.c.l.b16 %v527
        %v657 = vunpack.c.h.b16 %v527
        %v658 = vunpack.c.l.b16 %v528
        %v659 = vunpack.c.h.b16 %v528
        %v660 = vunpack.c.l.b16 %v529
        %v661 = vunpack.c.h.b16 %v529
        %v662 = vunpack.c.l.b16 %v530
        %v663 = vunpack.c.h.b16 %v530
        %v664 = vunpack.c.l.b16 %v531
        %v665 = vunpack.c.h.b16 %v531
        %v666 = vunpack.c.l.b16 %v532
        %v667 = vunpack.c.h.b16 %v532
        %v668 = vunpack.c.l.b16 %v533
        %v669 = vunpack.c.h.b16 %v533
        %v670 = vunpack.c.l.b16 %v534
        %v671 = vunpack.c.h.b16 %v534
        %v672 = vunpack.c.l.b16 %v535
        %v673 = vunpack.c.h.b16 %v535
        %v674 = vunpack.c.l.b16 %v536
        %v675 = vunpack.c.h.b16 %v536
        %v676 = vunpack.c.l.b16 %v537
        %v677 = vunpack.c.h.b16 %v537
        %v678 = vunpack.c.l.b16 %v538
        %v679 = vunpack.c.h.b16 %v538
        %v680 = vunpack.c.l.b16 %v539
        %v681 = vunpack.c.h.b16 %v539
        %v682 = vunpack.c.l.b16 %v540
        %v683 = vunpack.c.h.b16 %v540
        %v684 = vunpack.c.l.b16 %v541
        %v685 = vunpack.c.h.b16 %v541
        %v686 = vunpack.c.l.b16 %v542
        %v687 = vunpack.c.h.b16 %v542
        %v688 = vunpack.c.l.b16 %v543
        %v689 = vunpack.c.h.b16 %v543
        %v690 = vunpack.c.l.b16 %v544
        %v691 = vunpack.c.h.b16 %v544
        %v692 = vunpack.c.l.b16 %v545
        %v693 = vunpack.c.h.b16 %v545
        %v694 = vunpack.c.l.b16 %v546
        %v695 = vunpack.c.h.b16 %v546
        %v696 = vunpack.c.l.b16 %v547
        %v697 = vunpack.c.h.b16 %v547
        %v698 = vunpack.c.l.b16 %v548
        %v699 = vunpack.c.h.b16 %v548
        %v700 = vunpack.c.l.b16 %v549
        %v701 = vunpack.c.h.b16 %v549
        %v702 = vunpack.c.l.b16 %v550
        %v703 = vunpack.c.h.b16 %v550
        %v704 = vunpack.c.l.b16 %v551
        %v705 = vunpack.c.h.b16 %v551
        %v706 = vunpack.c.l.b16 %v552
        %v707 = vunpack.c.h.b16 %v552
        %v708 = vunpack.c.l.b16 %v553
        %v709 = vunpack.c.h.b16 %v553
        %v710 = vunpack.c.l.b16 %v554
        %v711 = vunpack.c.h.b16 %v554
        %v712 = vunpack.c.l.b16 %v555
        %v713 = vunpack.c.h.b16 %v555
        %v714 = vunpack.c.l.b16 %v556
        %v715 = vunpack.c.h.b16 %v556
        %v716 = vunpack.c.l.b16 %v557
        %v717 = vunpack.c.h.b16 %v557
        %v718 = vunpack.c.l.b16 %v558
        %v719 = vunpack.c.h.b16 %v558
        %v720 = vunpack.c.l.b16 %v559
        %v721 = vunpack.c.h.b16 %v559
        %v722 = vunpack.c.l.b16 %v560
        %v723 = vunpack.c.h.b16 %v560
        %v724 = vunpack.c.l.b16 %v561
        %v725 = vunpack.c.h.b16 %v561
        %v726 = vunpack.c.l.b16 %v562
        %v727 = vunpack.c.h.b16 %v562
        %v728 = vunpack.c.l.b16 %v563
        %v729 = vunpack.c.h.b16 %v563
        %v730 = vunpack.c.l.b16 %v564
        %v731 = vunpack.c.h.b16 %v564
        %v732 = vunpack.c.l.b16 %v565
        %v733 = vunpack.c.h.b16 %v565
        %v734 = vunpack.c.l.b16 %v566
        %v735 = vunpack.c.h.b16 %v566
        %v736 = vunpack.c.l.b16 %v567
        %v737 = vunpack.c.h.b16 %v567
        %v738 = vunpack.c.l.b16 %v568
        %v739 = vunpack.c.h.b16 %v568
        %v740 = vunpack.c.l.b16 %v569
        %v741 = vunpack.c.h.b16 %v569
        %v742 = vunpack.c.l.b16 %v570
        %v743 = vunpack.c.h.b16 %v570
        %v744 = vunpack.c.l.b16 %v571
        %v745 = vunpack.c.h.b16 %v571
        %v746 = vunpack.c.l.b16 %v572
        %v747 = vunpack.c.h.b16 %v572
        %v748 = vpack.c.b16 %v642, %v640
        %v749 = vpack.c.b16 %v643, %v641
        %v750 = vpack.c.b16 %v646, %v644
        %v751 = vpack.c.b16 %v647, %v645
        %v752 = vpack.c.b16 %v650, %v648
        %v753 = vpack.c.b16 %v651, %v649
        %v754 = vpack.c.b16 %v654, %v652
        %v755 = vpack.c.b16 %v655, %v653
        %v756 = vpack.c.b16 %v658, %v656
        %v757 = vpack.c.b16 %v659, %v657
        %v758 = vpack.c.b16 %v662, %v660
        %v759 = vpack.c.b16 %v663, %v661
        %v760 = vpack.c.b16 %v666, %v664
        %v761 = vpack.c.b16 %v667, %v665
        %v762 = vpack.c.b16 %v670, %v668
        %v763 = vpack.c.b16 %v671, %v669
        %v764 = vpack.c.b16 %v674, %v672
        %v765 = vpack.c.b16 %v675, %v673
        %v766 = vpack.c.b16 %v678, %v676
        %v767 = vpack.c.b16 %v679, %v677
        %v768 = vpack.c.b16 %v682, %v680
        %v769 = vpack.c.b16 %v683, %v681
        %v770 = vpack.c.b16 %v686, %v684
        %v771 = vpack.c.b16 %v687, %v685
        %v772 = vpack.c.b16 %v690, %v688
        %v773 = vpack.c.b16 %v691, %v689
        %v774 = vpack.c.b16 %v694, %v692
        %v775 = vpack.c.b16 %v695, %v693
        %v776 = vpack.c.b16 %v698, %v696
        %v777 = vpack.c.b16 %v699, %v697
        %v778 = vpack.c.b16 %v702, %v700
        %v779 = vpack.c.b16 %v703, %v701
        %v780 = vpack.c.b16 %v706, %v704
        %v781 = vpack.c.b16 %v707, %v705
        %v782 = vpack.c.b16 %v710, %v708
        %v783 = vpack.c.b16 %v711, %v709
        %v784 = vpack.c.b16 %v714, %v712
        %v785 = vpack.c.b16 %v715, %v713
        %v786 = vpack.c.b16 %v718, %v716
        %v787 = vpack.c.b16 %v719, %v717
        %v788 = vpack.c.b16 %v722, %v720
        %v789 = vpack.c.b16 %v723, %v721
        %v790 = vpack.c.b16 %v726, %v724
        %v791 = vpack.c.b16 %v727, %v725
        %v792 = vpack.c.b16 %v730, %v728
        %v793 = vpack.c.b16 %v731, %v729
        %v794 = vpack.c.b16 %v734, %v732
        %v795 = vpack.c.b16 %v735, %v733
        %v796 = vpack.c.b16 %v738, %v736
        %v797 = vpack.c.b16 %v739, %v737
        %v798 = vpack.c.b16 %v742, %v740
        %v799 = vpack.c.b16 %v743, %v741
        %v800 = vpack.c.b16 %v746, %v744
        %v801 = vpack.c.b16 %v747, %v745
        %v857 = vsel %vm453, %v518, 0
        %859 = vmatprep.subr.bf16.mxu0 %v763
        %860 = vmatpush1.bf16.msra.mxu0 %v762
        %861 = vmatprep.subr.bf16.mxu0 %v761
        %862 = vmatpush1.bf16.msra.mxu0 %v760
        %863 = vmatprep.subr.bf16.mxu0 %v759
        %864 = vmatpush1.bf16.msra.mxu0 %v758
        %865 = vmatprep.subr.bf16.mxu0 %v757
        %866 = vmatpush1.bf16.msra.mxu0 %v756
        %867 = vmatprep.subr.bf16.mxu0 %v755
        %868 = vmatpush1.bf16.msra.mxu0 %v754
        %869 = vmatprep.subr.bf16.mxu0 %v753
        %870 = vmatpush1.bf16.msra.mxu0 %v752
        %871 = vmatprep.subr.bf16.mxu0 %v751
        %872 = vmatpush1.bf16.msra.mxu0 %v750
        %873 = vmatprep.subr.bf16.mxu0 %v749
        %874 = vmatpush1.bf16.msra.mxu0 %v748
        %875 = vmatprep.subr.bf16.mxu0 %v779
        %876 = vmatpush2.bf16.msra.mxu0 %v778
        %877 = vmatprep.subr.bf16.mxu0 %v777
        %878 = vmatpush2.bf16.msra.mxu0 %v776
        %879 = vmatprep.subr.bf16.mxu0 %v775
        %880 = vmatpush2.bf16.msra.mxu0 %v774
        %881 = vmatprep.subr.bf16.mxu0 %v773
        %882 = vmatpush2.bf16.msra.mxu0 %v772
        %883 = vmatprep.subr.bf16.mxu0 %v771
        %884 = vmatpush2.bf16.msra.mxu0 %v770
        %885 = vmatprep.subr.bf16.mxu0 %v769
        %886 = vmatpush2.bf16.msra.mxu0 %v768
        %887 = vmatprep.subr.bf16.mxu0 %v767
        %888 = vmatpush2.bf16.msra.mxu0 %v766
        %889 = vmatprep.subr.bf16.mxu0 %v765
        %890 = vmatpush2.bf16.msra.mxu0 %v764
        %891 = vmatprep.mubr.bf16.mxu0 %v516
        %892 = vmatmul.mubr.bf16.gmra.mxu0 %v515
        %v893 = vpop.f32.mrf.mxu0
        %v894 = vadd.f32 %v579, %v893
        %v895 = vpop.f32.mrf.mxu0
        %v896 = vadd.f32 %v583, %v895
        %v897 = vpop.f32.mrf.mxu0
        %v898 = vadd.f32 %v579, %v897
        %v899 = vpop.f32.mrf.mxu0
        %v900 = vadd.f32 %v583, %v899
        %901 = vdwg.mxu0
        %902 = vmatprep.subr.bf16.mxu0 %v795
        %903 = vmatpush1.bf16.msra.mxu0 %v794
        %904 = vmatprep.subr.bf16.mxu0 %v793
        %905 = vmatpush1.bf16.msra.mxu0 %v792
        %906 = vmatprep.subr.bf16.mxu0 %v791
        %907 = vmatpush1.bf16.msra.mxu0 %v790
        %908 = vmatprep.subr.bf16.mxu0 %v789
        %909 = vmatpush1.bf16.msra.mxu0 %v788
        %910 = vmatprep.subr.bf16.mxu0 %v787
        %911 = vmatpush1.bf16.msra.mxu0 %v786
        %912 = vmatprep.subr.bf16.mxu0 %v785
        %913 = vmatpush1.bf16.msra.mxu0 %v784
        %914 = vmatprep.subr.bf16.mxu0 %v783
        %915 = vmatpush1.bf16.msra.mxu0 %v782
        %916 = vmatprep.subr.bf16.mxu0 %v781
        %917 = vmatpush1.bf16.msra.mxu0 %v780
        %918 = vmatprep.subr.bf16.mxu0 0
        %919 = vmatpush2.bf16.msra.mxu0 0
        %920 = vmatprep.subr.bf16.mxu0 0
        %921 = vmatpush2.bf16.msra.mxu0 0
        %922 = vmatprep.subr.bf16.mxu0 0
        %923 = vmatpush2.bf16.msra.mxu0 0
        %924 = vmatprep.subr.bf16.mxu0 0
        %925 = vmatpush2.bf16.msra.mxu0 0
        %926 = vmatprep.subr.bf16.mxu0 0
        %927 = vmatpush2.bf16.msra.mxu0 0
        %928 = vmatprep.subr.bf16.mxu0 %v801
        %929 = vmatpush2.bf16.msra.mxu0 %v800
        %930 = vmatprep.subr.bf16.mxu0 %v799
        %931 = vmatpush2.bf16.msra.mxu0 %v798
        %932 = vmatprep.subr.bf16.mxu0 %v797
        %933 = vmatpush2.bf16.msra.mxu0 %v796
        %934 = vmatprep.mubr.bf16.mxu0 %v857
        %935 = vmatmul.mubr.bf16.gmra.mxu0 %v517
        %v936 = vpop.f32.mrf.mxu0
        %v937 = vadd.f32 %v894, %v936
        %v938 = vpop.f32.mrf.mxu0
        %v939 = vadd.f32 %v896, %v938
        %v940 = vpop.f32.mrf.mxu0
        %v941 = vadd.f32 %v898, %v940
        %v942 = vpop.f32.mrf.mxu0
        %v943 = vadd.f32 %v900, %v942
        %944 = vdwg.mxu0
        %945 = vst [vmem:[%s212] sm:$0xff] %v937
        %946 = vst [vmem:[%s212 + $0x8] sm:$0xff] %v939
        %vm947 = vcmask 523264
        %948 = vst.msk [vmem:[%s212 + $0x10] sm:$0xff] %vm947, %v214
        %949 = vst [vmem:[%s212 + $0x18] sm:$0xff] %v941
        %950 = vst [vmem:[%s212 + $0x20] sm:$0xff] %v943
        %951 = vst.msk [vmem:[%s212 + $0x28] sm:$0xff] %vm947, %v215
        %p952 = scmp.lt.s32.totalorder %s16, 1
        %s953 = scalar_select %p952, %s16, 1
        %s954 = smul.addr %s953, 6
        %s955 = smul.addr %s954, 8
        %s956 = scalar_lea.vmem %s4, %s955
        // Predicated region
        $region41: #{_lambda_.1} parent=35 // pred_check
          %p957 = pneg %p123
        $region42: #{_lambda_.1} parent=35 // pred_check_branch
          %959 = sbr.rel (%p957) target = $region44
        $region43: #{_lambda_.1} parent=35 // pred_region
          _
        $region44: #{_lambda_.1} parent=35 // pred_fallthru
          _
      $region36: #{_lambda_.1} parent=5 // pred_fallthru
        _
      %p960 = scmp.le.s32.totalorder 2, %s11
      // Predicated region
      $region45: #{_lambda_.1} parent=5 // pred_check
        %p961 = pneg %p960
      $region46: #{_lambda_.1} parent=5 // pred_check_branch
        %963 = sbr.rel (%p961) target = $region48
      $region47: #{_lambda_.1} parent=5 // pred_region
        %s964 = ssub.s32 %s11, 2
        // Predicated region
        $region49: #{_lambda_.1} parent=47 // pred_check
          %p965 = pneg %p129
        $region50: #{_lambda_.1} parent=47 // pred_check_branch
          %967 = sbr.rel (%p965) target = $region52
        $region51: #{_lambda_.1} parent=47 // pred_region
          %p968 = scmp.lt.s32.totalorder %s17, 1
          %s969 = scalar_select %p968, %s17, 1
          %s970 = smul.addr %s969, 6
          %s971 = smul.addr %s970, 8
          %s972 = scalar_lea.vmem %s4, %s971
        $region52: #{_lambda_.1} parent=47 // pred_fallthru
          _
      $region48: #{_lambda_.1} parent=5 // pred_fallthru
        _
    $region6: #{_lambda_.1} parent=1 // loop_footer
      %s15 = sadd.s32 1, %s11
    $region7: #{_lambda_.1} parent=1 // loop_footer_branch
      %10 = sbr.rel target = $region3
    $region8: #{_lambda_.1} parent=1 // loop_exit
      _
    %973 = vsyncpa [#allocation5], 1
    %s974 = scalar_lea.sflag [#allocation5], 1
    %975 = vsyncpa %s974, 1

</llo_original>
